<compile_context>
chip_gen: v7x
topology: tpu7x:2x2x1
jax: 0.10.0
libtpu: 0.0.40
codegen_flags: <defaults>
</compile_context>

<pallas_src>
import jax
import jax.numpy as jnp
from jax.experimental import pallas as pl
from jax.experimental.pallas import tpu as pltpu

EMB_DIM = 16
MLP_HIDDEN = (64, 32, 16)


def _round_up(x: int, m: int) -> int:
    return ((x + m - 1) // m) * m


def _pick_tile_b(b_pad: int, desired: int) -> int:
    """Largest lane-aligned tile that divides b_pad, is <= desired, and (when
    possible) leaves >= 2 grid tiles so v7x's second TensorCore gets work."""
    n = b_pad // 128
    cap = max(1, min(desired // 128, n))
    if n >= 2:
        cap = max(1, min(cap, n // 2))
    for k in range(cap, 0, -1):
        if n % k == 0:
            return k * 128
    return 128


def neumf_kernel(
    gmf_u_ref, gmf_i_ref,        # (EMB, TB) bf16
    mlp_u_ref, mlp_i_ref,        # (EMB, TB) bf16
    side_ref,                    # (1, TB)  f32: wp_ub*ub + wp_ib*ib + avg + bp
    w1u_ref, w1i_ref, b1_ref,    # (H1, EMB) bf16 x2, (H1, 1) f32
    w2_ref, b2_ref,              # (H2, H1)  bf16,    (H2, 1) f32
    w3_ref, b3_ref,              # (H3, H2)  bf16,    (H3, 1) f32
    wp_gmf_ref, wp_mlp_ref,      # (EMB, 1) f32, (H3, 1) f32
    out_ref,                     # (1, TB)  f32 lane-dense output
):
    f32 = jnp.float32
    bf16 = jnp.bfloat16

    # ---- GMF branch: elementwise product on the VPU, in f32 (v5e-safe) ----
    gmf = gmf_u_ref[...].astype(f32) * gmf_i_ref[...].astype(f32)          # (EMB, TB)

    # ---- MLP branch: layer 1 as two K=16 bf16 dots (no concat), f32 acc ----
    h = (jnp.dot(w1u_ref[...], mlp_u_ref[...], preferred_element_type=f32)
         + jnp.dot(w1i_ref[...], mlp_i_ref[...], preferred_element_type=f32)
         + b1_ref[...])
    h = jnp.maximum(h, 0.0)                                                # (H1, TB) f32

    h = jnp.dot(w2_ref[...], h.astype(bf16),
                preferred_element_type=f32) + b2_ref[...]
    h = jnp.maximum(h, 0.0)                                                # (H2, TB) f32

    h = jnp.dot(w3_ref[...], h.astype(bf16),
                preferred_element_type=f32) + b3_ref[...]
    h = jnp.maximum(h, 0.0)                                                # (H3, TB) f32

    # ---- predict head: VPU broadcast-multiply + XLU sublane reductions ----
    # concat([gmf, mlp, ub, ib]) @ Wp + bp + avg; the ub/ib/avg/bp terms were
    # pre-folded into side_ref by the wrapper.
    pred = (jnp.sum(gmf * wp_gmf_ref[...], axis=0, keepdims=True)
            + jnp.sum(h * wp_mlp_ref[...], axis=0, keepdims=True)
            + side_ref[...])

    out_ref[...] = pred                                                    # (1, TB)


def neumf_forward(params, user_indices, item_indices, desired_tile_b: int = 8192):
    """Plain-JAX glue (gathers only, no relayout passes) + tiled Pallas kernel."""
    emb = EMB_DIM
    h1, h2, h3 = MLP_HIDDEN
    f32 = jnp.float32

    B = user_indices.shape[0]
    B_pad = _round_up(B, 128)                      # lane-align only; no tile over-pad
    tile_b = _pick_tile_b(B_pad, max(128, desired_tile_b))
    num_tiles = B_pad // tile_b

    pad = B_pad - B
    u = jnp.pad(user_indices, (0, pad))
    it = jnp.pad(item_indices, (0, pad))

    # --- gathers (XLA); tables are stored pre-transposed (EMB, N), so the
    #     result is already batch-on-lanes (EMB, B_pad) with no .T relayout ---
    gmf_u = jnp.take(params["gmf_user_emb_t"], u, axis=1)                  # (EMB, B_pad) bf16
    gmf_i = jnp.take(params["gmf_item_emb_t"], it, axis=1)                 # (EMB, B_pad) bf16
    mlp_u = jnp.take(params["mlp_user_emb_t"], u, axis=1)                  # (EMB, B_pad) bf16
    mlp_i = jnp.take(params["mlp_item_emb_t"], it, axis=1)                 # (EMB, B_pad) bf16

    # --- fold all rank-1 head terms into a single f32 row (fuses w/ gathers) ---
    wp = params["wp"].astype(f32)                                          # (1, EMB+H3+2)
    w_ub = wp[0, emb + h3]
    w_ib = wp[0, emb + h3 + 1]
    side = (w_ub * jnp.take(params["user_bias"], u)
            + w_ib * jnp.take(params["item_bias"], it)
            + jnp.take(params["movie_avg"], it)
            + params["bp"][0]).astype(f32).reshape(1, B_pad)               # (1, B_pad)

    # --- predict-head / layer weights (tiny, resident in VMEM) ---
    wp_gmf = wp[0, :emb].reshape(emb, 1)                                   # (EMB, 1) f32
    wp_mlp = wp[0, emb:emb + h3].reshape(h3, 1)                            # (H3, 1) f32
    w1u = params["w1"][:, :emb]                                            # (H1, EMB) bf16
    w1i = params["w1"][:, emb:]                                            # (H1, EMB) bf16
    b1c = params["b1"].astype(f32).reshape(h1, 1)
    b2c = params["b2"].astype(f32).reshape(h2, 1)
    b3c = params["b3"].astype(f32).reshape(h3, 1)

    kernel_inputs = (
        gmf_u, gmf_i, mlp_u, mlp_i, side,
        w1u, w1i, b1c, params["w2"], b2c, params["w3"], b3c,
        wp_gmf, wp_mlp,
    )

    def batch_spec(rows):
        return pl.BlockSpec((rows, tile_b), lambda i: (0, i))

    def resident_spec(shape):
        return pl.BlockSpec(shape, lambda i: (0, 0))

    in_specs = [
        batch_spec(emb), batch_spec(emb), batch_spec(emb), batch_spec(emb),
        batch_spec(1),
        resident_spec((h1, emb)), resident_spec((h1, emb)), resident_spec((h1, 1)),
        resident_spec((h2, h1)), resident_spec((h2, 1)),
        resident_spec((h3, h2)), resident_spec((h3, 1)),
        resident_spec((emb, 1)), resident_spec((h3, 1)),
    ]
    out_spec = pl.BlockSpec((1, tile_b), lambda i: (0, i))

    flops = B_pad * (2 * (2 * emb * h1 + h1 * h2 + h2 * h3) + 4 * emb + 2 * h3 + 8)
    bytes_accessed = int(sum(int(x.size) * x.dtype.itemsize for x in kernel_inputs)
                         + B_pad * 4)

    out = pl.pallas_call(
        neumf_kernel,
        out_shape=jax.ShapeDtypeStruct((1, B_pad), f32),
        grid=(num_tiles,),
        in_specs=in_specs,
        out_specs=out_spec,
        compiler_params=pltpu.CompilerParams(
            dimension_semantics=("parallel",),
            vmem_limit_bytes=32 * 1024 * 1024),
        cost_estimate=pl.CostEstimate(
            flops=flops, transcendentals=0, bytes_accessed=bytes_accessed),
    )(*kernel_inputs)

    return out[0, :B]


neumf_forward_jit = jax.jit(neumf_forward, static_argnames=("desired_tile_b",))


def init_params(key, num_users, num_movies, emb_dim=EMB_DIM, mlp_hidden=MLP_HIDDEN):
    """Parameter layout chosen for the kernel:
       embedding tables pre-transposed (EMB, N) and stored bf16;
       Linear weights PyTorch-style (out, in) stored bf16; biases f32."""
    ks = jax.random.split(key, 16)
    nu, nm = num_users + 1, num_movies + 1
    h1, h2, h3 = mlp_hidden
    bf16 = jnp.bfloat16

    def rnd(k, shape, scale=0.1):
        return (scale * jax.random.normal(k, shape)).astype(jnp.float32)

    params = {
        "movie_avg": rnd(ks[0], (nm,), 1.0) * 0.5 + 3.0,      # plausible avg ratings
        "user_bias": rnd(ks[1], (nu,)),
        "item_bias": rnd(ks[2], (nm,)),
        "gmf_user_emb_t": rnd(ks[3], (emb_dim, nu)).astype(bf16),
        "gmf_item_emb_t": rnd(ks[4], (emb_dim, nm)).astype(bf16),
        "mlp_user_emb_t": rnd(ks[5], (emb_dim, nu)).astype(bf16),
        "mlp_item_emb_t": rnd(ks[6], (emb_dim, nm)).astype(bf16),
        "w1": rnd(ks[7], (h1, 2 * emb_dim)).astype(bf16),
        "b1": rnd(ks[8], (h1,)),
        "w2": rnd(ks[9], (h2, h1)).astype(bf16),
        "b2": rnd(ks[10], (h2,)),
        "w3": rnd(ks[11], (h3, h2)).astype(bf16),
        "b3": rnd(ks[12], (h3,)),
        "wp": rnd(ks[13], (1, emb_dim + h3 + 2)),
        "bp": rnd(ks[14], (1,)),
    }
    return params


def neumf_reference(params, user_indices, item_indices):
    """Pure-JAX f32 reference mirroring the PyTorch forward (eval mode)."""
    f32 = jnp.float32
    avg = jnp.take(params["movie_avg"], item_indices)
    ub = jnp.take(params["user_bias"], user_indices)[:, None]
    ib = jnp.take(params["item_bias"], item_indices)[:, None]
    gmf = (jnp.take(params["gmf_user_emb_t"], user_indices, axis=1).astype(f32)
           * jnp.take(params["gmf_item_emb_t"], item_indices, axis=1).astype(f32)).T
    mlp_in = jnp.concatenate(
        [jnp.take(params["mlp_user_emb_t"], user_indices, axis=1).astype(f32).T,
         jnp.take(params["mlp_item_emb_t"], item_indices, axis=1).astype(f32).T],
        axis=1)
    h = jnp.maximum(mlp_in @ params["w1"].astype(f32).T + params["b1"], 0.0)
    h = jnp.maximum(h @ params["w2"].astype(f32).T + params["b2"], 0.0)
    h = jnp.maximum(h @ params["w3"].astype(f32).T + params["b3"], 0.0)
    x = jnp.concatenate([gmf, h, ub, ib], axis=1)
    pred = (x @ params["wp"].T + params["bp"])[:, 0]
    return pred + avg


if __name__ == "__main__":
    key = jax.random.PRNGKey(0)
    k_params, k_u, k_i = jax.random.split(key, 3)

    num_users, num_movies = 20, 30
    batch = 8

    params = init_params(k_params, num_users, num_movies)
    user_indices = jax.random.randint(k_u, (batch,), 0, num_users + 1, dtype=jnp.int32)
    item_indices = jax.random.randint(k_i, (batch,), 0, num_movies + 1, dtype=jnp.int32)

    out = neumf_forward_jit(params, user_indices, item_indices)
    out = jax.block_until_ready(out)

    ref = neumf_reference(params, user_indices, item_indices)
    assert out.shape == (batch,)
    # bf16 activation storage between MLP layers -> slightly loosened tolerance.
    assert jnp.allclose(out, ref, atol=2e-2, rtol=2e-2), (out, ref)

    print("KERNEL_OK")
</pallas_src>

<mosaic_0001>
module attributes {stable_mosaic.version = 11 : i64} {
  func.func @neumf_kernel(%arg0: i32, %arg1: memref<16x128xbf16, #tpu.memory_space<vmem>>, %arg2: memref<16x128xbf16, #tpu.memory_space<vmem>>, %arg3: memref<16x128xbf16, #tpu.memory_space<vmem>>, %arg4: memref<16x128xbf16, #tpu.memory_space<vmem>>, %arg5: memref<1x128xf32, #tpu.memory_space<vmem>>, %arg6: memref<64x16xbf16, #tpu.memory_space<vmem>>, %arg7: memref<64x16xbf16, #tpu.memory_space<vmem>>, %arg8: memref<64x1xf32, #tpu.memory_space<vmem>>, %arg9: memref<32x64xbf16, #tpu.memory_space<vmem>>, %arg10: memref<32x1xf32, #tpu.memory_space<vmem>>, %arg11: memref<16x32xbf16, #tpu.memory_space<vmem>>, %arg12: memref<16x1xf32, #tpu.memory_space<vmem>>, %arg13: memref<16x1xf32, #tpu.memory_space<vmem>>, %arg14: memref<16x1xf32, #tpu.memory_space<vmem>>, %arg15: memref<1x128xf32, #tpu.memory_space<vmem>>) attributes {dimension_semantics = [#tpu.dimension_semantics<parallel>], iteration_bounds = array<i64: 1>, scalar_prefetch = 0 : i64, scratch_operands = 0 : i64, tpu.core_type = #tpu.core_type<tc>, window_params = [{transform_indices = @transform_0, window_bounds = array<i64: 16, 128>}, {transform_indices = @transform_1, window_bounds = array<i64: 16, 128>}, {transform_indices = @transform_2, window_bounds = array<i64: 16, 128>}, {transform_indices = @transform_3, window_bounds = array<i64: 16, 128>}, {transform_indices = @transform_4, window_bounds = array<i64: 1, 128>}, {pipeline_mode = #tpu.pipeline_mode<synchronous>, transform_indices = @transform_5, window_bounds = array<i64: 64, 16>}, {pipeline_mode = #tpu.pipeline_mode<synchronous>, transform_indices = @transform_6, window_bounds = array<i64: 64, 16>}, {pipeline_mode = #tpu.pipeline_mode<synchronous>, transform_indices = @transform_7, window_bounds = array<i64: 64, 1>}, {pipeline_mode = #tpu.pipeline_mode<synchronous>, transform_indices = @transform_8, window_bounds = array<i64: 32, 64>}, {pipeline_mode = #tpu.pipeline_mode<synchronous>, transform_indices = @transform_9, window_bounds = array<i64: 32, 1>}, {pipeline_mode = #tpu.pipeline_mode<synchronous>, transform_indices = @transform_10, window_bounds = array<i64: 16, 32>}, {pipeline_mode = #tpu.pipeline_mode<synchronous>, transform_indices = @transform_11, window_bounds = array<i64: 16, 1>}, {pipeline_mode = #tpu.pipeline_mode<synchronous>, transform_indices = @transform_12, window_bounds = array<i64: 16, 1>}, {pipeline_mode = #tpu.pipeline_mode<synchronous>, transform_indices = @transform_13, window_bounds = array<i64: 16, 1>}, {transform_indices = @transform_14, window_bounds = array<i64: 1, 128>}]} {
    %c0 = arith.constant 0 : index
    %c0_0 = arith.constant 0 : index
    %0 = vector.load %arg1[%c0, %c0_0] : memref<16x128xbf16, #tpu.memory_space<vmem>>, vector<16x128xbf16>
    %1 = arith.extf %0 : vector<16x128xbf16> to vector<16x128xf32>
    %c0_1 = arith.constant 0 : index
    %c0_2 = arith.constant 0 : index
    %2 = vector.load %arg2[%c0_1, %c0_2] : memref<16x128xbf16, #tpu.memory_space<vmem>>, vector<16x128xbf16>
    %3 = arith.extf %2 : vector<16x128xbf16> to vector<16x128xf32>
    %4 = arith.mulf %1, %3 : vector<16x128xf32>
    %c0_3 = arith.constant 0 : index
    %c0_4 = arith.constant 0 : index
    %5 = vector.load %arg6[%c0_3, %c0_4] : memref<64x16xbf16, #tpu.memory_space<vmem>>, vector<64x16xbf16>
    %c0_5 = arith.constant 0 : index
    %c0_6 = arith.constant 0 : index
    %6 = vector.load %arg3[%c0_5, %c0_6] : memref<16x128xbf16, #tpu.memory_space<vmem>>, vector<16x128xbf16>
    %cst = arith.constant dense<0.000000e+00> : vector<64x128xf32>
    %7 = tpu.matmul %5, %6, %cst {dimension_numbers = #tpu.dot_dimension_numbers<[1], [0], [0], [1], [0, 0, 1, 1], [], []>} : vector<64x16xbf16>, vector<16x128xbf16>, vector<64x128xf32> -> vector<64x128xf32>
    %c0_7 = arith.constant 0 : index
    %c0_8 = arith.constant 0 : index
    %8 = vector.load %arg7[%c0_7, %c0_8] : memref<64x16xbf16, #tpu.memory_space<vmem>>, vector<64x16xbf16>
    %c0_9 = arith.constant 0 : index
    %c0_10 = arith.constant 0 : index
    %9 = vector.load %arg4[%c0_9, %c0_10] : memref<16x128xbf16, #tpu.memory_space<vmem>>, vector<16x128xbf16>
    %cst_11 = arith.constant dense<0.000000e+00> : vector<64x128xf32>
    %10 = tpu.matmul %8, %9, %cst_11 {dimension_numbers = #tpu.dot_dimension_numbers<[1], [0], [0], [1], [0, 0, 1, 1], [], []>} : vector<64x16xbf16>, vector<16x128xbf16>, vector<64x128xf32> -> vector<64x128xf32>
    %11 = arith.addf %7, %10 : vector<64x128xf32>
    %c0_12 = arith.constant 0 : index
    %c0_13 = arith.constant 0 : index
    %12 = vector.load %arg8[%c0_12, %c0_13] : memref<64x1xf32, #tpu.memory_space<vmem>>, vector<64x1xf32>
    %13 = vector.broadcast %12 : vector<64x1xf32> to vector<64x128xf32>
    %14 = arith.addf %11, %13 : vector<64x128xf32>
    %cst_14 = arith.constant 0.000000e+00 : f32
    %15 = vector.broadcast %cst_14 : f32 to vector<64x128xf32>
    %16 = arith.maximumf %14, %15 : vector<64x128xf32>
    %c0_15 = arith.constant 0 : index
    %c0_16 = arith.constant 0 : index
    %17 = vector.load %arg9[%c0_15, %c0_16] : memref<32x64xbf16, #tpu.memory_space<vmem>>, vector<32x64xbf16>
    %18 = arith.truncf %16 : vector<64x128xf32> to vector<64x128xbf16>
    %cst_17 = arith.constant dense<0.000000e+00> : vector<32x128xf32>
    %19 = tpu.matmul %17, %18, %cst_17 {dimension_numbers = #tpu.dot_dimension_numbers<[1], [0], [0], [1], [0, 0, 1, 1], [], []>} : vector<32x64xbf16>, vector<64x128xbf16>, vector<32x128xf32> -> vector<32x128xf32>
    %c0_18 = arith.constant 0 : index
    %c0_19 = arith.constant 0 : index
    %20 = vector.load %arg10[%c0_18, %c0_19] : memref<32x1xf32, #tpu.memory_space<vmem>>, vector<32x1xf32>
    %21 = vector.broadcast %20 : vector<32x1xf32> to vector<32x128xf32>
    %22 = arith.addf %19, %21 : vector<32x128xf32>
    %cst_20 = arith.constant 0.000000e+00 : f32
    %23 = vector.broadcast %cst_20 : f32 to vector<32x128xf32>
    %24 = arith.maximumf %22, %23 : vector<32x128xf32>
    %c0_21 = arith.constant 0 : index
    %c0_22 = arith.constant 0 : index
    %25 = vector.load %arg11[%c0_21, %c0_22] : memref<16x32xbf16, #tpu.memory_space<vmem>>, vector<16x32xbf16>
    %26 = arith.truncf %24 : vector<32x128xf32> to vector<32x128xbf16>
    %cst_23 = arith.constant dense<0.000000e+00> : vector<16x128xf32>
    %27 = tpu.matmul %25, %26, %cst_23 {dimension_numbers = #tpu.dot_dimension_numbers<[1], [0], [0], [1], [0, 0, 1, 1], [], []>} : vector<16x32xbf16>, vector<32x128xbf16>, vector<16x128xf32> -> vector<16x128xf32>
    %c0_24 = arith.constant 0 : index
    %c0_25 = arith.constant 0 : index
    %28 = vector.load %arg12[%c0_24, %c0_25] : memref<16x1xf32, #tpu.memory_space<vmem>>, vector<16x1xf32>
    %29 = vector.broadcast %28 : vector<16x1xf32> to vector<16x128xf32>
    %30 = arith.addf %27, %29 : vector<16x128xf32>
    %cst_26 = arith.constant 0.000000e+00 : f32
    %31 = vector.broadcast %cst_26 : f32 to vector<16x128xf32>
    %32 = arith.maximumf %30, %31 : vector<16x128xf32>
    %c0_27 = arith.constant 0 : index
    %c0_28 = arith.constant 0 : index
    %33 = vector.load %arg13[%c0_27, %c0_28] : memref<16x1xf32, #tpu.memory_space<vmem>>, vector<16x1xf32>
    %34 = vector.broadcast %33 : vector<16x1xf32> to vector<16x128xf32>
    %35 = arith.mulf %4, %34 : vector<16x128xf32>
    %cst_29 = arith.constant dense<0.000000e+00> : vector<128xf32>
    %36 = vector.multi_reduction <add>, %35, %cst_29 [0] : vector<16x128xf32> to vector<128xf32>
    %37 = vector.shape_cast %36 : vector<128xf32> to vector<1x128xf32>
    %c0_30 = arith.constant 0 : index
    %c0_31 = arith.constant 0 : index
    %38 = vector.load %arg14[%c0_30, %c0_31] : memref<16x1xf32, #tpu.memory_space<vmem>>, vector<16x1xf32>
    %39 = vector.broadcast %38 : vector<16x1xf32> to vector<16x128xf32>
    %40 = arith.mulf %32, %39 : vector<16x128xf32>
    %cst_32 = arith.constant dense<0.000000e+00> : vector<128xf32>
    %41 = vector.multi_reduction <add>, %40, %cst_32 [0] : vector<16x128xf32> to vector<128xf32>
    %42 = vector.shape_cast %41 : vector<128xf32> to vector<1x128xf32>
    %43 = arith.addf %37, %42 : vector<1x128xf32>
    %c0_33 = arith.constant 0 : index
    %c0_34 = arith.constant 0 : index
    %44 = vector.load %arg5[%c0_33, %c0_34] : memref<1x128xf32, #tpu.memory_space<vmem>>, vector<1x128xf32>
    %45 = arith.addf %43, %44 : vector<1x128xf32>
    %c0_35 = arith.constant 0 : index
    %c0_36 = arith.constant 0 : index
    %46 = vector.load %arg15[%c0_35, %c0_36] : memref<1x128xf32, #tpu.memory_space<vmem>>, vector<1x128xf32>
    tpu.vector_store %arg15[%c0_35, %c0_36], %45 {strides = array<i32>} : memref<1x128xf32, #tpu.memory_space<vmem>>, vector<1x128xf32>,
    return
  }
  func.func @transform_0(%arg0: i32) -> (i32, i32) {
    %c0_i32 = arith.constant 0 : i32
    %c0_i32_0 = arith.constant 0 : i32
    return %c0_i32, %arg0 : i32, i32
  }
  func.func @transform_1(%arg0: i32) -> (i32, i32) {
    %c0_i32 = arith.constant 0 : i32
    %c0_i32_0 = arith.constant 0 : i32
    return %c0_i32, %arg0 : i32, i32
  }
  func.func @transform_2(%arg0: i32) -> (i32, i32) {
    %c0_i32 = arith.constant 0 : i32
    %c0_i32_0 = arith.constant 0 : i32
    return %c0_i32, %arg0 : i32, i32
  }
  func.func @transform_3(%arg0: i32) -> (i32, i32) {
    %c0_i32 = arith.constant 0 : i32
    %c0_i32_0 = arith.constant 0 : i32
    return %c0_i32, %arg0 : i32, i32
  }
  func.func @transform_4(%arg0: i32) -> (i32, i32) {
    %c0_i32 = arith.constant 0 : i32
    %c0_i32_0 = arith.constant 0 : i32
    return %c0_i32, %arg0 : i32, i32
  }
  func.func @transform_5(%arg0: i32) -> (i32, i32) {
    %c0_i32 = arith.constant 0 : i32
    %c0_i32_0 = arith.constant 0 : i32
    %c0_i32_1 = arith.constant 0 : i32
    return %c0_i32, %c0_i32_0 : i32, i32
  }
  func.func @transform_6(%arg0: i32) -> (i32, i32) {
    %c0_i32 = arith.constant 0 : i32
    %c0_i32_0 = arith.constant 0 : i32
    %c0_i32_1 = arith.constant 0 : i32
    return %c0_i32, %c0_i32_0 : i32, i32
  }
  func.func @transform_7(%arg0: i32) -> (i32, i32) {
    %c0_i32 = arith.constant 0 : i32
    %c0_i32_0 = arith.constant 0 : i32
    %c0_i32_1 = arith.constant 0 : i32
    return %c0_i32, %c0_i32_0 : i32, i32
  }
  func.func @transform_8(%arg0: i32) -> (i32, i32) {
    %c0_i32 = arith.constant 0 : i32
    %c0_i32_0 = arith.constant 0 : i32
    %c0_i32_1 = arith.constant 0 : i32
    return %c0_i32, %c0_i32_0 : i32, i32
  }
  func.func @transform_9(%arg0: i32) -> (i32, i32) {
    %c0_i32 = arith.constant 0 : i32
    %c0_i32_0 = arith.constant 0 : i32
    %c0_i32_1 = arith.constant 0 : i32
    return %c0_i32, %c0_i32_0 : i32, i32
  }
  func.func @transform_10(%arg0: i32) -> (i32, i32) {
    %c0_i32 = arith.constant 0 : i32
    %c0_i32_0 = arith.constant 0 : i32
    %c0_i32_1 = arith.constant 0 : i32
    return %c0_i32, %c0_i32_0 : i32, i32
  }
  func.func @transform_11(%arg0: i32) -> (i32, i32) {
    %c0_i32 = arith.constant 0 : i32
    %c0_i32_0 = arith.constant 0 : i32
    %c0_i32_1 = arith.constant 0 : i32
    return %c0_i32, %c0_i32_0 : i32, i32
  }
  func.func @transform_12(%arg0: i32) -> (i32, i32) {
    %c0_i32 = arith.constant 0 : i32
    %c0_i32_0 = arith.constant 0 : i32
    %c0_i32_1 = arith.constant 0 : i32
    return %c0_i32, %c0_i32_0 : i32, i32
  }
  func.func @transform_13(%arg0: i32) -> (i32, i32) {
    %c0_i32 = arith.constant 0 : i32
    %c0_i32_0 = arith.constant 0 : i32
    %c0_i32_1 = arith.constant 0 : i32
    return %c0_i32, %c0_i32_0 : i32, i32
  }
  func.func @transform_14(%arg0: i32) -> (i32, i32) {
    %c0_i32 = arith.constant 0 : i32
    %c0_i32_0 = arith.constant 0 : i32
    return %c0_i32, %arg0 : i32, i32
  }
}

</mosaic_0001>

<llo_original>
// kernel: neumf_forward.1
$region0: #{neumf_forward.1}
  #allocation0 [shape = 'u32[]', space=smem, size = 0x4, offset = 0x4, fixed_abs, tag = 'smem constant byte address 0x4 - core index']
  #allocation1 [shape = 'u32[144,128]{1,0:T(1,128)}', space=vmem, size = 0x12000, scoped, tag = 'internal scratch']
  %s0 = inlined_call_operand.vmem [shape: bf16[16,128], index: 0, kind: input, shape index: {}]
  %s1 = inlined_call_operand.vmem [shape: bf16[16,128], index: 1, kind: input, shape index: {}]
  %s2 = inlined_call_operand.vmem [shape: bf16[16,128], index: 2, kind: input, shape index: {}]
  %s3 = inlined_call_operand.vmem [shape: bf16[16,128], index: 3, kind: input, shape index: {}]
  %s4 = inlined_call_operand.vmem [shape: f32[1,128], index: 4, kind: input, shape index: {}]
  %s5 = inlined_call_operand.vmem [shape: bf16[64,16], index: 5, kind: input, shape index: {}]
  %s6 = inlined_call_operand.vmem [shape: bf16[64,16], index: 6, kind: input, shape index: {}]
  %s7 = inlined_call_operand.vmem [shape: f32[64,1], index: 7, kind: input, shape index: {}]
  %s8 = inlined_call_operand.vmem [shape: bf16[32,64], index: 8, kind: input, shape index: {}]
  %s9 = inlined_call_operand.vmem [shape: f32[32,1], index: 9, kind: input, shape index: {}]
  %s10 = inlined_call_operand.vmem [shape: bf16[16,32], index: 10, kind: input, shape index: {}]
  %s11 = inlined_call_operand.vmem [shape: f32[16,1], index: 11, kind: input, shape index: {}]
  %s12 = inlined_call_operand.vmem [shape: f32[16,1], index: 12, kind: input, shape index: {}]
  %s13 = inlined_call_operand.vmem [shape: f32[16,1], index: 13, kind: input, shape index: {}]
  %s14 = inlined_call_operand.vmem [shape: f32[1,128], index: 14, kind: output, shape index: {}]
  %s15 = sld [smem:[#allocation0]]
  $region66: #{neumf_forward.1} parent=0
    _
  %s17 = ssub.s32 1, %s15
  %s18 = scalar_select 0, %s17, %s15
  // Predicated region
  $region2: #{neumf_forward.1} parent=0 // pred_check
    _
  $region3: #{neumf_forward.1} parent=0 // pred_check_branch
    %20 = sbr.rel (0) target = $region5
  $region4: #{neumf_forward.1} parent=0 // pred_region
    _
  $region5: #{neumf_forward.1} parent=0 // pred_fallthru
    _
  // Predicated region
  $region6: #{neumf_forward.1} parent=0 // pred_check
    _
  $region7: #{neumf_forward.1} parent=0 // pred_check_branch
    %22 = sbr.rel (0) target = $region9
  $region8: #{neumf_forward.1} parent=0 // pred_region
    _
  $region9: #{neumf_forward.1} parent=0 // pred_fallthru
    _
  // Predicated region
  $region10: #{neumf_forward.1} parent=0 // pred_check
    _
  $region11: #{neumf_forward.1} parent=0 // pred_check_branch
    %24 = sbr.rel (0) target = $region13
  $region12: #{neumf_forward.1} parent=0 // pred_region
    _
  $region13: #{neumf_forward.1} parent=0 // pred_fallthru
    _
  // Predicated region
  $region14: #{neumf_forward.1} parent=0 // pred_check
    _
  $region15: #{neumf_forward.1} parent=0 // pred_check_branch
    %26 = sbr.rel (0) target = $region17
  $region16: #{neumf_forward.1} parent=0 // pred_region
    _
  $region17: #{neumf_forward.1} parent=0 // pred_fallthru
    _
  // Predicated region
  $region18: #{neumf_forward.1} parent=0 // pred_check
    _
  $region19: #{neumf_forward.1} parent=0 // pred_check_branch
    %28 = sbr.rel (0) target = $region21
  $region20: #{neumf_forward.1} parent=0 // pred_region
    _
  $region21: #{neumf_forward.1} parent=0 // pred_fallthru
    _
  // Predicated region
  $region22: #{neumf_forward.1} parent=0 // pred_check
    _
  $region23: #{neumf_forward.1} parent=0 // pred_check_branch
    %30 = sbr.rel (0) target = $region25
  $region24: #{neumf_forward.1} parent=0 // pred_region
    _
  $region25: #{neumf_forward.1} parent=0 // pred_fallthru
    _
  // Predicated region
  $region26: #{neumf_forward.1} parent=0 // pred_check
    _
  $region27: #{neumf_forward.1} parent=0 // pred_check_branch
    %32 = sbr.rel (0) target = $region29
  $region28: #{neumf_forward.1} parent=0 // pred_region
    _
  $region29: #{neumf_forward.1} parent=0 // pred_fallthru
    _
  // Predicated region
  $region30: #{neumf_forward.1} parent=0 // pred_check
    _
  $region31: #{neumf_forward.1} parent=0 // pred_check_branch
    %34 = sbr.rel (0) target = $region33
  $region32: #{neumf_forward.1} parent=0 // pred_region
    _
  $region33: #{neumf_forward.1} parent=0 // pred_fallthru
    _
  // Predicated region
  $region34: #{neumf_forward.1} parent=0 // pred_check
    _
  $region35: #{neumf_forward.1} parent=0 // pred_check_branch
    %36 = sbr.rel (0) target = $region37
  $region36: #{neumf_forward.1} parent=0 // pred_region
    _
  $region37: #{neumf_forward.1} parent=0 // pred_fallthru
    _
  // Predicated region
  $region38: #{neumf_forward.1} parent=0 // pred_check
    _
  $region39: #{neumf_forward.1} parent=0 // pred_check_branch
    %38 = sbr.rel (0) target = $region41
  $region40: #{neumf_forward.1} parent=0 // pred_region
    _
  $region41: #{neumf_forward.1} parent=0 // pred_fallthru
    _
  // Predicated region
  $region42: #{neumf_forward.1} parent=0 // pred_check
    _
  $region43: #{neumf_forward.1} parent=0 // pred_check_branch
    %40 = sbr.rel (0) target = $region45
  $region44: #{neumf_forward.1} parent=0 // pred_region
    _
  $region45: #{neumf_forward.1} parent=0 // pred_fallthru
    _
  // Predicated region
  $region46: #{neumf_forward.1} parent=0 // pred_check
    _
  $region47: #{neumf_forward.1} parent=0 // pred_check_branch
    %42 = sbr.rel (0) target = $region49
  $region48: #{neumf_forward.1} parent=0 // pred_region
    _
  $region49: #{neumf_forward.1} parent=0 // pred_fallthru
    _
  // Predicated region
  $region50: #{neumf_forward.1} parent=0 // pred_check
    _
  $region51: #{neumf_forward.1} parent=0 // pred_check_branch
    %44 = sbr.rel (0) target = $region53
  $region52: #{neumf_forward.1} parent=0 // pred_region
    _
  $region53: #{neumf_forward.1} parent=0 // pred_fallthru
    _
  // Predicated region
  $region54: #{neumf_forward.1} parent=0 // pred_check
    _
  $region55: #{neumf_forward.1} parent=0 // pred_check_branch
    %46 = sbr.rel (0) target = $region57
  $region56: #{neumf_forward.1} parent=0 // pred_region
    _
  $region57: #{neumf_forward.1} parent=0 // pred_fallthru
    _
  %v48 = vld [vmem:[%s0] sm:$0xf]
  %v49 = vld [vmem:[%s0 + $0x4] sm:$0xf]
  %v50 = vunpack.c.l.bf16 %v48
  %v51 = vunpack.c.l.bf16 %v49
  %v52 = vld [vmem:[%s1] sm:$0xf]
  %v53 = vld [vmem:[%s1 + $0x4] sm:$0xf]
  %v54 = vunpack.c.l.bf16 %v52
  %v55 = vunpack.c.l.bf16 %v53
  %v56 = vmul.f32 %v50, %v54
  %v57 = vmul.f32 %v51, %v55
  %v58 = vld [vmem:[%s5] sm:$0xf]
  %v59 = vld [vmem:[%s5 + $0x4] sm:$0xf]
  %v60 = vld [vmem:[%s5 + $0x8] sm:$0xf]
  %v61 = vld [vmem:[%s5 + $0xc] sm:$0xf]
  %v62 = vld [vmem:[%s5 + $0x10] sm:$0xf]
  %v63 = vld [vmem:[%s5 + $0x14] sm:$0xf]
  %v64 = vld [vmem:[%s5 + $0x18] sm:$0xf]
  %v65 = vld [vmem:[%s5 + $0x1c] sm:$0xf]
  %v66 = vld [vmem:[%s2] sm:$0xf]
  %v67 = vld [vmem:[%s2 + $0x4] sm:$0xf]
  %v68 = vld [vmem:[%s6] sm:$0xf]
  %v69 = vld [vmem:[%s6 + $0x4] sm:$0xf]
  %v70 = vld [vmem:[%s6 + $0x8] sm:$0xf]
  %v71 = vld [vmem:[%s6 + $0xc] sm:$0xf]
  %v72 = vld [vmem:[%s6 + $0x10] sm:$0xf]
  %v73 = vld [vmem:[%s6 + $0x14] sm:$0xf]
  %v74 = vld [vmem:[%s6 + $0x18] sm:$0xf]
  %v75 = vld [vmem:[%s6 + $0x1c] sm:$0xf]
  %v76 = vld [vmem:[%s3] sm:$0xf]
  %v77 = vld [vmem:[%s3 + $0x4] sm:$0xf]
  %v86 = vunpack.c.l.b16 %v68
  %v87 = vunpack.c.l.b16 %v69
  %v88 = vunpack.c.l.b16 %v70
  %v89 = vunpack.c.l.b16 %v71
  %v90 = vunpack.c.l.b16 %v72
  %v91 = vunpack.c.l.b16 %v73
  %v92 = vunpack.c.l.b16 %v74
  %v93 = vunpack.c.l.b16 %v75
  %v94 = vpack.c.b16 %v87, %v86
  %v95 = vpack.c.b16 %v89, %v88
  %v96 = vpack.c.b16 %v91, %v90
  %v97 = vpack.c.b16 %v93, %v92
  %v100 = vunpack.c.l.b16 %v76
  %v101 = vunpack.c.l.b16 %v77
  %v102 = vpack.c.b16 %v101, %v100
  %vm104 = vcmask 130048
  %v106 = vsel %vm104, %v94, 0
  %v109 = vsel %vm104, %v95, 0
  %v112 = vsel %vm104, %v96, 0
  %v115 = vsel %vm104, %v97, 0
  %117 = vmatprep.subr.bf16.mxu0 0
  %118 = vmatpush1.bf16.msra.mxu0 %v102
  %119 = vmatprep.subr.bf16.mxu0 0
  %120 = vmatpush1.bf16.msra.mxu0 0
  %121 = vmatprep.subr.bf16.mxu0 0
  %122 = vmatpush1.bf16.msra.mxu0 0
  %123 = vmatprep.subr.bf16.mxu0 0
  %124 = vmatpush1.bf16.msra.mxu0 0
  %125 = vmatprep.subr.bf16.mxu0 0
  %126 = vmatpush1.bf16.msra.mxu0 0
  %127 = vmatprep.subr.bf16.mxu0 0
  %128 = vmatpush1.bf16.msra.mxu0 0
  %129 = vmatprep.subr.bf16.mxu0 0
  %130 = vmatpush1.bf16.msra.mxu0 0
  %131 = vmatprep.subr.bf16.mxu0 0
  %132 = vmatpush1.bf16.msra.mxu0 0
  %133 = vmatprep.subr.bf16.mxu0 0
  %134 = vmatpush1.bf16.msra.mxu0 0
  %135 = vmatprep.subr.bf16.mxu0 0
  %136 = vmatpush1.bf16.msra.mxu0 0
  %137 = vmatprep.subr.bf16.mxu0 0
  %138 = vmatpush1.bf16.msra.mxu0 0
  %139 = vmatprep.subr.bf16.mxu0 0
  %140 = vmatpush1.bf16.msra.mxu0 0
  %141 = vmatprep.subr.bf16.mxu0 0
  %142 = vmatpush1.bf16.msra.mxu0 0
  %143 = vmatprep.subr.bf16.mxu0 0
  %144 = vmatpush1.bf16.msra.mxu0 0
  %145 = vmatprep.subr.bf16.mxu0 0
  %146 = vmatpush1.bf16.msra.mxu0 0
  %147 = vmatprep.subr.bf16.mxu0 0
  %148 = vmatpush1.bf16.msra.mxu0 0
  %149 = vmatprep.mubr.bf16.mxu0 0
  %150 = vmatmul.mubr.bf16.gmra.mrb[0].mxu0 %v106
  %v151 = vpop.f32.mrb[0].mxu0
  %v152 = vadd.f32 0.0, %v151
  %v153 = vpop.f32.mrb[0].mxu0
  %v154 = vpop.f32.mrb[0].mxu0
  %v155 = vadd.f32 0.0, %v154
  %v156 = vpop.f32.mrb[0].mxu0
  %157 = vmatprep.mubr.bf16.mxu0 0
  %158 = vmatmul.mubr.bf16.gmra.mrb[0].mxu0 %v109
  %v159 = vpop.f32.mrb[0].mxu0
  %v160 = vadd.f32 0.0, %v159
  %v161 = vpop.f32.mrb[0].mxu0
  %v162 = vpop.f32.mrb[0].mxu0
  %v163 = vadd.f32 0.0, %v162
  %v164 = vpop.f32.mrb[0].mxu0
  %165 = vmatprep.mubr.bf16.mxu0 0
  %166 = vmatmul.mubr.bf16.gmra.mrb[0].mxu0 %v112
  %v167 = vpop.f32.mrb[0].mxu0
  %v168 = vadd.f32 0.0, %v167
  %v169 = vpop.f32.mrb[0].mxu0
  %v170 = vpop.f32.mrb[0].mxu0
  %v171 = vadd.f32 0.0, %v170
  %v172 = vpop.f32.mrb[0].mxu0
  %173 = vmatprep.mubr.bf16.mxu0 0
  %174 = vmatmul.mubr.bf16.gmra.mrb[0].mxu0 %v115
  %v175 = vpop.f32.mrb[0].mxu0
  %v176 = vadd.f32 0.0, %v175
  %v177 = vpop.f32.mrb[0].mxu0
  %v178 = vpop.f32.mrb[0].mxu0
  %v179 = vadd.f32 0.0, %v178
  %v180 = vpop.f32.mrb[0].mxu0
  %181 = vdwg.mxu0
  %v190 = vunpack.c.l.b16 %v58
  %v191 = vunpack.c.l.b16 %v59
  %v192 = vunpack.c.l.b16 %v60
  %v193 = vunpack.c.l.b16 %v61
  %v194 = vunpack.c.l.b16 %v62
  %v195 = vunpack.c.l.b16 %v63
  %v196 = vunpack.c.l.b16 %v64
  %v197 = vunpack.c.l.b16 %v65
  %v198 = vpack.c.b16 %v191, %v190
  %v199 = vpack.c.b16 %v193, %v192
  %v200 = vpack.c.b16 %v195, %v194
  %v201 = vpack.c.b16 %v197, %v196
  %v204 = vunpack.c.l.b16 %v66
  %v205 = vunpack.c.l.b16 %v67
  %v206 = vpack.c.b16 %v205, %v204
  %v209 = vsel %vm104, %v198, 0
  %v212 = vsel %vm104, %v199, 0
  %v215 = vsel %vm104, %v200, 0
  %v218 = vsel %vm104, %v201, 0
  %220 = vmatprep.subr.bf16.mxu0 0
  %221 = vmatpush1.bf16.msra.mxu0 %v206
  %222 = vmatprep.subr.bf16.mxu0 0
  %223 = vmatpush1.bf16.msra.mxu0 0
  %224 = vmatprep.subr.bf16.mxu0 0
  %225 = vmatpush1.bf16.msra.mxu0 0
  %226 = vmatprep.subr.bf16.mxu0 0
  %227 = vmatpush1.bf16.msra.mxu0 0
  %228 = vmatprep.subr.bf16.mxu0 0
  %229 = vmatpush1.bf16.msra.mxu0 0
  %230 = vmatprep.subr.bf16.mxu0 0
  %231 = vmatpush1.bf16.msra.mxu0 0
  %232 = vmatprep.subr.bf16.mxu0 0
  %233 = vmatpush1.bf16.msra.mxu0 0
  %234 = vmatprep.subr.bf16.mxu0 0
  %235 = vmatpush1.bf16.msra.mxu0 0
  %236 = vmatprep.subr.bf16.mxu0 0
  %237 = vmatpush1.bf16.msra.mxu0 0
  %238 = vmatprep.subr.bf16.mxu0 0
  %239 = vmatpush1.bf16.msra.mxu0 0
  %240 = vmatprep.subr.bf16.mxu0 0
  %241 = vmatpush1.bf16.msra.mxu0 0
  %242 = vmatprep.subr.bf16.mxu0 0
  %243 = vmatpush1.bf16.msra.mxu0 0
  %244 = vmatprep.subr.bf16.mxu0 0
  %245 = vmatpush1.bf16.msra.mxu0 0
  %246 = vmatprep.subr.bf16.mxu0 0
  %247 = vmatpush1.bf16.msra.mxu0 0
  %248 = vmatprep.subr.bf16.mxu0 0
  %249 = vmatpush1.bf16.msra.mxu0 0
  %250 = vmatprep.subr.bf16.mxu0 0
  %251 = vmatpush1.bf16.msra.mxu0 0
  %252 = vmatprep.mubr.bf16.mxu0 0
  %253 = vmatmul.mubr.bf16.gmra.mrb[0].mxu0 %v209
  %v254 = vpop.f32.mrb[0].mxu0
  %v255 = vadd.f32 %v152, %v254
  %v256 = vpop.f32.mrb[0].mxu0
  %v257 = vpop.f32.mrb[0].mxu0
  %v258 = vadd.f32 %v155, %v257
  %v259 = vpop.f32.mrb[0].mxu0
  %260 = vmatprep.mubr.bf16.mxu0 0
  %261 = vmatmul.mubr.bf16.gmra.mrb[0].mxu0 %v212
  %v262 = vpop.f32.mrb[0].mxu0
  %v263 = vadd.f32 %v160, %v262
  %v264 = vpop.f32.mrb[0].mxu0
  %v265 = vpop.f32.mrb[0].mxu0
  %v266 = vadd.f32 %v163, %v265
  %v267 = vpop.f32.mrb[0].mxu0
  %268 = vmatprep.mubr.bf16.mxu0 0
  %269 = vmatmul.mubr.bf16.gmra.mrb[0].mxu0 %v215
  %v270 = vpop.f32.mrb[0].mxu0
  %v271 = vadd.f32 %v168, %v270
  %v272 = vpop.f32.mrb[0].mxu0
  %v273 = vpop.f32.mrb[0].mxu0
  %v274 = vadd.f32 %v171, %v273
  %v275 = vpop.f32.mrb[0].mxu0
  %276 = vmatprep.mubr.bf16.mxu0 0
  %277 = vmatmul.mubr.bf16.gmra.mrb[0].mxu0 %v218
  %v278 = vpop.f32.mrb[0].mxu0
  %v279 = vadd.f32 %v176, %v278
  %v280 = vpop.f32.mrb[0].mxu0
  %v281 = vpop.f32.mrb[0].mxu0
  %v282 = vadd.f32 %v179, %v281
  %v283 = vpop.f32.mrb[0].mxu0
  %284 = vdwg.mxu0
  %v285 = vld [vmem:[%s7] sm:$0xff]
  %v286 = vld [vmem:[%s7 + $0x8] sm:$0xff]
  %v287 = vld [vmem:[%s7 + $0x10] sm:$0xff]
  %v288 = vld [vmem:[%s7 + $0x18] sm:$0xff]
  %v289 = vld [vmem:[%s7 + $0x20] sm:$0xff]
  %v290 = vld [vmem:[%s7 + $0x28] sm:$0xff]
  %v291 = vld [vmem:[%s7 + $0x30] sm:$0xff]
  %v292 = vld [vmem:[%s7 + $0x38] sm:$0xff]
  %294 = vset.pattern.permute.xlu0 0
  %295 = vperm.xlu0 %294, %v285
  %v296 = vpop.permute.xlu0 %295
  %299 = vset.pattern.permute.xlu0 0
  %300 = vperm.xlu0 %299, %v286
  %v301 = vpop.permute.xlu0 %300
  %304 = vset.pattern.permute.xlu0 0
  %305 = vperm.xlu0 %304, %v287
  %v306 = vpop.permute.xlu0 %305
  %309 = vset.pattern.permute.xlu0 0
  %310 = vperm.xlu0 %309, %v288
  %v311 = vpop.permute.xlu0 %310
  %314 = vset.pattern.permute.xlu0 0
  %315 = vperm.xlu0 %314, %v289
  %v316 = vpop.permute.xlu0 %315
  %319 = vset.pattern.permute.xlu0 0
  %320 = vperm.xlu0 %319, %v290
  %v321 = vpop.permute.xlu0 %320
  %324 = vset.pattern.permute.xlu0 0
  %325 = vperm.xlu0 %324, %v291
  %v326 = vpop.permute.xlu0 %325
  %329 = vset.pattern.permute.xlu0 0
  %330 = vperm.xlu0 %329, %v292
  %v331 = vpop.permute.xlu0 %330
  %v333 = vadd.f32 %v255, %v296
  %v334 = vadd.f32 %v258, %v301
  %v335 = vadd.f32 %v263, %v306
  %v336 = vadd.f32 %v266, %v311
  %v337 = vadd.f32 %v271, %v316
  %v338 = vadd.f32 %v274, %v321
  %v339 = vadd.f32 %v279, %v326
  %v340 = vadd.f32 %v282, %v331
  %v341 = vmax.f32 %v333, 0.0
  %v342 = vmax.f32 %v334, 0.0
  %v343 = vmax.f32 %v335, 0.0
  %v344 = vmax.f32 %v336, 0.0
  %v345 = vmax.f32 %v337, 0.0
  %v346 = vmax.f32 %v338, 0.0
  %v347 = vmax.f32 %v339, 0.0
  %v348 = vmax.f32 %v340, 0.0
  %v349 = vld [vmem:[%s8] sm:$0xf]
  %v350 = vld [vmem:[%s8 + $0x4] sm:$0xf]
  %v351 = vld [vmem:[%s8 + $0x8] sm:$0xf]
  %v352 = vld [vmem:[%s8 + $0xc] sm:$0xf]
  %v353 = vpack.c.bf16 %v342, %v341
  %v354 = vpack.c.bf16 %v344, %v343
  %v355 = vpack.c.bf16 %v346, %v345
  %v356 = vpack.c.bf16 %v348, %v347
  %v357 = vld [vmem:[%s9] sm:$0xff]
  %v358 = vld [vmem:[%s9 + $0x8] sm:$0xff]
  %v359 = vld [vmem:[%s9 + $0x10] sm:$0xff]
  %v360 = vld [vmem:[%s9 + $0x18] sm:$0xff]
  %362 = vset.pattern.permute.xlu0 0
  %363 = vperm.xlu0 %362, %v357
  %v364 = vpop.permute.xlu0 %363
  %367 = vset.pattern.permute.xlu0 0
  %368 = vperm.xlu0 %367, %v358
  %v369 = vpop.permute.xlu0 %368
  %372 = vset.pattern.permute.xlu0 0
  %373 = vperm.xlu0 %372, %v359
  %v374 = vpop.permute.xlu0 %373
  %377 = vset.pattern.permute.xlu0 0
  %378 = vperm.xlu0 %377, %v360
  %v379 = vpop.permute.xlu0 %378
  %v385 = vunpack.c.l.b16 %v349
  %v386 = vunpack.c.l.b16 %v350
  %v387 = vunpack.c.l.b16 %v351
  %v388 = vunpack.c.l.b16 %v352
  %v389 = vpack.c.b16 %v386, %v385
  %v390 = vpack.c.b16 %v388, %v387
  %vm391 = vcmask 523264
  %v393 = vsel %vm391, %v389, 0
  %v396 = vsel %vm391, %v390, 0
  %398 = vmatprep.subr.bf16.mxu0 0
  %399 = vmatpush1.bf16.msra.mxu0 %v353
  %400 = vmatprep.subr.bf16.mxu0 0
  %401 = vmatpush1.bf16.msra.mxu0 %v354
  %402 = vmatprep.subr.bf16.mxu0 0
  %403 = vmatpush1.bf16.msra.mxu0 %v355
  %404 = vmatprep.subr.bf16.mxu0 0
  %405 = vmatpush1.bf16.msra.mxu0 %v356
  %406 = vmatprep.subr.bf16.mxu0 0
  %407 = vmatpush1.bf16.msra.mxu0 0
  %408 = vmatprep.subr.bf16.mxu0 0
  %409 = vmatpush1.bf16.msra.mxu0 0
  %410 = vmatprep.subr.bf16.mxu0 0
  %411 = vmatpush1.bf16.msra.mxu0 0
  %412 = vmatprep.subr.bf16.mxu0 0
  %413 = vmatpush1.bf16.msra.mxu0 0
  %414 = vmatprep.subr.bf16.mxu0 0
  %415 = vmatpush1.bf16.msra.mxu0 0
  %416 = vmatprep.subr.bf16.mxu0 0
  %417 = vmatpush1.bf16.msra.mxu0 0
  %418 = vmatprep.subr.bf16.mxu0 0
  %419 = vmatpush1.bf16.msra.mxu0 0
  %420 = vmatprep.subr.bf16.mxu0 0
  %421 = vmatpush1.bf16.msra.mxu0 0
  %422 = vmatprep.subr.bf16.mxu0 0
  %423 = vmatpush1.bf16.msra.mxu0 0
  %424 = vmatprep.subr.bf16.mxu0 0
  %425 = vmatpush1.bf16.msra.mxu0 0
  %426 = vmatprep.subr.bf16.mxu0 0
  %427 = vmatpush1.bf16.msra.mxu0 0
  %428 = vmatprep.subr.bf16.mxu0 0
  %429 = vmatpush1.bf16.msra.mxu0 0
  %430 = vmatprep.mubr.bf16.mxu0 0
  %431 = vmatmul.mubr.bf16.gmra.mrb[0].mxu0 %v393
  %v432 = vpop.f32.mrb[0].mxu0
  %v433 = vadd.f32 %v364, %v432
  %v434 = vpop.f32.mrb[0].mxu0
  %v435 = vpop.f32.mrb[0].mxu0
  %v436 = vadd.f32 %v369, %v435
  %v437 = vpop.f32.mrb[0].mxu0
  %438 = vmatprep.mubr.bf16.mxu0 0
  %439 = vmatmul.mubr.bf16.gmra.mrb[0].mxu0 %v396
  %v440 = vpop.f32.mrb[0].mxu0
  %v441 = vadd.f32 %v374, %v440
  %v442 = vpop.f32.mrb[0].mxu0
  %v443 = vpop.f32.mrb[0].mxu0
  %v444 = vadd.f32 %v379, %v443
  %v445 = vpop.f32.mrb[0].mxu0
  %446 = vdwg.mxu0
  %v447 = vmax.f32 %v433, 0.0
  %v448 = vmax.f32 %v436, 0.0
  %v449 = vmax.f32 %v441, 0.0
  %v450 = vmax.f32 %v444, 0.0
  %v451 = vld [vmem:[%s10] sm:$0xf]
  %v452 = vld [vmem:[%s10 + $0x4] sm:$0xf]
  %v453 = vpack.c.bf16 %v448, %v447
  %v454 = vpack.c.bf16 %v450, %v449
  %v455 = vld [vmem:[%s11] sm:$0xff]
  %v456 = vld [vmem:[%s11 + $0x8] sm:$0xff]
  %458 = vset.pattern.permute.xlu0 0
  %459 = vperm.xlu0 %458, %v455
  %v460 = vpop.permute.xlu0 %459
  %463 = vset.pattern.permute.xlu0 0
  %464 = vperm.xlu0 %463, %v456
  %v465 = vpop.permute.xlu0 %464
  %v469 = vunpack.c.l.b16 %v451
  %v470 = vunpack.c.l.b16 %v452
  %v471 = vpack.c.b16 %v470, %v469
  %vm472 = vcmask 261120
  %v474 = vsel %vm472, %v471, 0
  %476 = vmatprep.subr.bf16.mxu0 0
  %477 = vmatpush1.bf16.msra.mxu0 %v453
  %478 = vmatprep.subr.bf16.mxu0 0
  %479 = vmatpush1.bf16.msra.mxu0 %v454
  %480 = vmatprep.subr.bf16.mxu0 0
  %481 = vmatpush1.bf16.msra.mxu0 0
  %482 = vmatprep.subr.bf16.mxu0 0
  %483 = vmatpush1.bf16.msra.mxu0 0
  %484 = vmatprep.subr.bf16.mxu0 0
  %485 = vmatpush1.bf16.msra.mxu0 0
  %486 = vmatprep.subr.bf16.mxu0 0
  %487 = vmatpush1.bf16.msra.mxu0 0
  %488 = vmatprep.subr.bf16.mxu0 0
  %489 = vmatpush1.bf16.msra.mxu0 0
  %490 = vmatprep.subr.bf16.mxu0 0
  %491 = vmatpush1.bf16.msra.mxu0 0
  %492 = vmatprep.subr.bf16.mxu0 0
  %493 = vmatpush1.bf16.msra.mxu0 0
  %494 = vmatprep.subr.bf16.mxu0 0
  %495 = vmatpush1.bf16.msra.mxu0 0
  %496 = vmatprep.subr.bf16.mxu0 0
  %497 = vmatpush1.bf16.msra.mxu0 0
  %498 = vmatprep.subr.bf16.mxu0 0
  %499 = vmatpush1.bf16.msra.mxu0 0
  %500 = vmatprep.subr.bf16.mxu0 0
  %501 = vmatpush1.bf16.msra.mxu0 0
  %502 = vmatprep.subr.bf16.mxu0 0
  %503 = vmatpush1.bf16.msra.mxu0 0
  %504 = vmatprep.subr.bf16.mxu0 0
  %505 = vmatpush1.bf16.msra.mxu0 0
  %506 = vmatprep.subr.bf16.mxu0 0
  %507 = vmatpush1.bf16.msra.mxu0 0
  %508 = vmatprep.mubr.bf16.mxu0 0
  %509 = vmatmul.mubr.bf16.gmra.mrb[0].mxu0 %v474
  %v510 = vpop.f32.mrb[0].mxu0
  %v511 = vadd.f32 %v460, %v510
  %v512 = vpop.f32.mrb[0].mxu0
  %v513 = vpop.f32.mrb[0].mxu0
  %v514 = vadd.f32 %v465, %v513
  %v515 = vpop.f32.mrb[0].mxu0
  %516 = vdwg.mxu0
  %v517 = vmax.f32 %v511, 0.0
  %v518 = vmax.f32 %v514, 0.0
  %v519 = vld [vmem:[%s12] sm:$0xff]
  %v520 = vld [vmem:[%s12 + $0x8] sm:$0xff]
  %522 = vset.pattern.permute.xlu0 0
  %523 = vperm.xlu0 %522, %v519
  %v524 = vpop.permute.xlu0 %523
  %527 = vset.pattern.permute.xlu0 0
  %528 = vperm.xlu0 %527, %v520
  %v529 = vpop.permute.xlu0 %528
  %v531 = vmul.f32 %v56, %v524
  %v532 = vmul.f32 %v57, %v529
  %v533 = vadd.f32 %v531, %v532
  %v534 = vrot.slane %v533, 4
  %v535 = vadd.f32 %v533, %v534
  %v536 = vrot.slane %v535, 2
  %v537 = vadd.f32 %v535, %v536
  %v538 = vrot.slane %v537, 1
  %v539 = vadd.f32 %v537, %v538
  %v540 = vld [vmem:[%s13] sm:$0xff]
  %v541 = vld [vmem:[%s13 + $0x8] sm:$0xff]
  %543 = vset.pattern.permute.xlu0 0
  %544 = vperm.xlu0 %543, %v540
  %v545 = vpop.permute.xlu0 %544
  %548 = vset.pattern.permute.xlu0 0
  %549 = vperm.xlu0 %548, %v541
  %v550 = vpop.permute.xlu0 %549
  %v552 = vmul.f32 %v517, %v545
  %v553 = vmul.f32 %v518, %v550
  %v554 = vadd.f32 %v552, %v553
  %v555 = vrot.slane %v554, 4
  %v556 = vadd.f32 %v554, %v555
  %v557 = vrot.slane %v556, 2
  %v558 = vadd.f32 %v556, %v557
  %v559 = vrot.slane %v558, 1
  %v560 = vadd.f32 %v558, %v559
  %v561 = vadd.f32 %v539, %v560
  %v562 = vld [vmem:[%s4] sm:$0x1]
  %v563 = vadd.f32 %v561, %v562
  %564 = vst [vmem:[%s14] sm:$0x1] %v563
  // Predicated region
  $region58: #{neumf_forward.1} parent=0 // pred_check
    _
  $region59: #{neumf_forward.1} parent=0 // pred_check_branch
    %566 = sbr.rel (0) target = $region61
  $region60: #{neumf_forward.1} parent=0 // pred_region
    _
  $region61: #{neumf_forward.1} parent=0 // pred_fallthru
    _
  // Predicated region
  $region62: #{neumf_forward.1} parent=0 // pred_check
    _
  $region63: #{neumf_forward.1} parent=0 // pred_check_branch
    %568 = sbr.rel (0) target = $region65
  $region64: #{neumf_forward.1} parent=0 // pred_region
    _
  $region65: #{neumf_forward.1} parent=0 // pred_fallthru
    _

</llo_original>
